<compile_context>
chip_gen: v5e
topology: v5e:2x2
jax: 0.10.0
libtpu: 0.0.40
codegen_flags: <defaults>
</compile_context>

<pallas_src>
import numpy as np
import jax
import jax.numpy as jnp
from jax.experimental import pallas as pl
from jax.experimental.pallas import tpu as pltpu


_LANE = 128
_VMEM_LIMIT_CAP = 48 * 1024 * 1024   # stay well under v7x's 64 MiB physical VMEM
_X_BLOCK_BUDGET = 24 * 1024 * 1024   # budget for the double-buffered big input block


# ----------------------------------------------------------------------------
# Deterministic parameter initialization (synthetic; no checkpoint loading).
# ----------------------------------------------------------------------------
def _trunc_fourier_cmat(num_bins, k):
    """Truncated-Fourier coding matrix, shape (num_bins, k): cos/sin pairs of
    harmonics 1, 2, ... (zeroth harmonic excluded)."""
    t = np.arange(num_bins, dtype=np.float64) / float(num_bins)
    n_freqs = int(np.ceil(k / 2.0))
    cols = []
    for f in range(1, n_freqs + 1):
        cols.append(np.cos(2.0 * np.pi * f * t))
        cols.append(np.sin(2.0 * np.pi * f * t))
    return np.stack(cols, axis=-1)[:, :k].astype(np.float32)


def _rand_cmat(num_bins, k, seed=0):
    rng = np.random.RandomState(seed)
    C = (rng.randn(num_bins, k) * 0.01).astype(np.float32)
    return np.clip(C, -1.0, 1.0)


# ----------------------------------------------------------------------------
# Tile pickers / compiler params.
# ----------------------------------------------------------------------------
def _pick_tl(L, tl_max):
    """Contraction tile: full L, or a multiple-of-128 divisor of L (keeps the
    in-kernel slice of the resident coding matrix lane-aligned)."""
    if L <= tl_max:
        return L
    t = (tl_max // _LANE) * _LANE
    while t >= _LANE:
        if L % t == 0:
            return t
        t -= _LANE
    return L


def _pick_tq(Q, contraction_rows, itemsize, tq_max, n_outer):
    """Lane tile: multiple of 128 (or full Q), sized so the double-buffered
    input block stays under budget, and so >=2 parallel grid blocks exist
    (v7x has two TensorCores)."""
    if Q <= _LANE:
        return Q
    cap = _X_BLOCK_BUDGET // (2 * max(contraction_rows, 1) * itemsize)
    cap = max(_LANE, (cap // _LANE) * _LANE)
    tq = min(tq_max, cap, (Q // _LANE) * _LANE)
    if n_outer * ((Q + tq - 1) // tq) < 2:
        half = (Q + 1) // 2
        tq = max(_LANE, ((half + _LANE - 1) // _LANE) * _LANE)
    return tq


def _compiler_params(semantics, vmem_est_bytes):
    limit = int(min(_VMEM_LIMIT_CAP,
                    max(vmem_est_bytes * 13 // 10 + (2 << 20), 16 << 20)))
    return pltpu.CompilerParams(dimension_semantics=semantics,
                                vmem_limit_bytes=limit)


# ----------------------------------------------------------------------------
# Pass 1: temporal projection  out[n, k, q] = sum_l ct[k, l] * x[n, l, q]
# ----------------------------------------------------------------------------
def _temporal_kernel_single(x_ref, ct_ref, o_ref):
    # x_ref: (1, L, TQ)   ct_ref: (k, L) resident   o_ref: (1, k, TQ)
    o_ref[0] = jnp.dot(ct_ref[...], x_ref[0],
                       preferred_element_type=jnp.float32).astype(o_ref.dtype)


def _make_temporal_kernel_tiled(TL):
    def kernel(x_ref, ct_ref, o_ref, acc_ref):
        # x_ref: (1, TL, TQ)   ct_ref: (k, L) resident   acc_ref: (k, TQ) f32
        t = pl.program_id(2)

        @pl.when(t == 0)
        def _():
            acc_ref[...] = jnp.zeros_like(acc_ref)

        start = pl.multiple_of(t * TL, TL)
        acc_ref[...] += jnp.dot(ct_ref[:, pl.ds(start, TL)], x_ref[0],
                                preferred_element_type=jnp.float32)

        @pl.when(t == pl.num_programs(2) - 1)
        def _():
            o_ref[0] = acc_ref[...].astype(o_ref.dtype)

    return kernel


def _temporal_project(x3, ct, *, out_dtype, nt_blocks=1, fold_nt=False,
                      tl_max=1024, tq_max=4096):
    """x3: (N, L, Q) -> ct @ x3 per slab, streamed through the MXU.

    Returns (out, packed):
      packed=True : out has shape (N // nt_blocks, k, nt_blocks * Q); the time
                    block is folded into the lane axis (out[b, k, t*Q + q]),
                    so the final layout needs only a metadata reshape.
      packed=False: out has shape (N, k, Q).
    """
    N, L, Q = x3.shape
    k = ct.shape[0]
    TL = _pick_tl(L, tl_max)
    TQ = _pick_tq(Q, TL, x3.dtype.itemsize, tq_max, N)

    # Prefer a lane tile that divides Q so nt_blocks can be folded into the
    # output lane axis (removes the output-sized XLA transpose).
    if fold_nt and nt_blocks > 1 and Q % _LANE == 0 and Q % TQ != 0:
        d = (TQ // _LANE) * _LANE
        while d >= _LANE and Q % d != 0:
            d -= _LANE
        if d >= _LANE and d * 4 >= TQ:
            TQ = d

    n_q = pl.cdiv(Q, TQ)
    n_l = L // TL
    packed = fold_nt and nt_blocks > 1 and TQ % _LANE == 0 and Q % TQ == 0

    if packed:
        qpb = Q // TQ
        out_shape = jax.ShapeDtypeStruct((N // nt_blocks, k, nt_blocks * Q),
                                         out_dtype)
    else:
        out_shape = jax.ShapeDtypeStruct((N, k, Q), out_dtype)

    vmem_est = (2 * TL * TQ * x3.dtype.itemsize
                + 2 * k * L * ct.dtype.itemsize
                + 2 * k * TQ * jnp.dtype(out_dtype).itemsize
                + (k * TQ * 4 if n_l > 1 else 0))

    if n_l == 1:
        if packed:
            out_idx = lambda n, q: (n // nt_blocks, 0, (n % nt_blocks) * qpb + q)
        else:
            out_idx = lambda n, q: (n, 0, q)
        out = pl.pallas_call(
            _temporal_kernel_single,
            out_shape=out_shape,
            grid=(N, n_q),
            in_specs=[
                pl.BlockSpec((1, L, TQ), lambda n, q: (n, 0, q)),
                pl.BlockSpec((k, L), lambda n, q: (0, 0)),        # resident
            ],
            out_specs=pl.BlockSpec((1, k, TQ), out_idx),
            compiler_params=_compiler_params(("parallel", "parallel"), vmem_est),
        )(x3, ct)
    else:
        if packed:
            out_idx = lambda n, q, t: (n // nt_blocks, 0,
                                       (n % nt_blocks) * qpb + q)
        else:
            out_idx = lambda n, q, t: (n, 0, q)
        out = pl.pallas_call(
            _make_temporal_kernel_tiled(TL),
            out_shape=out_shape,
            grid=(N, n_q, n_l),
            in_specs=[
                pl.BlockSpec((1, TL, TQ), lambda n, q, t: (n, t, q)),
                pl.BlockSpec((k, L), lambda n, q, t: (0, 0)),     # resident
            ],
            out_specs=pl.BlockSpec((1, k, TQ), out_idx),
            scratch_shapes=[pltpu.VMEM((k, TQ), jnp.float32)],
            compiler_params=_compiler_params(
                ("parallel", "parallel", "arbitrary"), vmem_est),
        )(x3, ct)
    return out, packed


# ----------------------------------------------------------------------------
# Pass 2: grouped sdf x sdf spatial pooling on the small intermediate.
#   out[n, k, q] = sum_s wxy[k, s] * xpm[n, s, k, q]
# ----------------------------------------------------------------------------
def _make_spatial_kernel(S):
    def kernel(x_ref, w_ref, o_ref):
        # x_ref: (1, S, k, TQo)   w_ref: (k, S) resident   o_ref: (1, k, TQo)
        w = w_ref[...].astype(jnp.float32)
        acc = w[:, 0:1] * x_ref[0, 0].astype(jnp.float32)
        for s in range(1, S):            # S = sdf**2, unrolled at trace time
            acc = acc + w[:, s:s + 1] * x_ref[0, s].astype(jnp.float32)
        o_ref[0] = acc.astype(o_ref.dtype)   # single lane-dense store
    return kernel


def _spatial_pool(xpm, wxy_flat, *, nt_blocks=1, tq_max=4096):
    """xpm: (N, S, k, Qout) patch-major; wxy_flat: (k, S) -> f32 output.

    Returns (out, packed) analogous to _temporal_project."""
    N, S, k, Qout = xpm.shape
    TQo = _pick_tq(Qout, S * k, xpm.dtype.itemsize, tq_max, N)
    n_q = pl.cdiv(Qout, TQo)
    packed = nt_blocks > 1 and TQo % _LANE == 0 and Qout % TQo == 0

    if packed:
        qpb = Qout // TQo
        out_shape = jax.ShapeDtypeStruct((N // nt_blocks, k, nt_blocks * Qout),
                                         jnp.float32)
        out_idx = lambda n, q: (n // nt_blocks, 0, (n % nt_blocks) * qpb + q)
    else:
        out_shape = jax.ShapeDtypeStruct((N, k, Qout), jnp.float32)
        out_idx = lambda n, q: (n, 0, q)

    vmem_est = (2 * S * k * TQo * xpm.dtype.itemsize
                + 2 * k * S * 4 + 2 * k * TQo * 4)

    out = pl.pallas_call(
        _make_spatial_kernel(S),
        out_shape=out_shape,
        grid=(N, n_q),
        in_specs=[
            pl.BlockSpec((1, S, k, TQo), lambda n, q: (n, 0, 0, q)),
            pl.BlockSpec((k, S), lambda n, q: (0, 0)),            # resident
        ],
        out_specs=pl.BlockSpec((1, k, TQo), out_idx),
        compiler_params=_compiler_params(("parallel", "parallel"), vmem_est),
    )(xpm, wxy_flat)
    return out, packed


# ----------------------------------------------------------------------------
# Full separable forward.
# ----------------------------------------------------------------------------
def csph_encode_separable(x, ct, wxy, nt_blocks, sdf, *,
                          compute_dtype=jnp.bfloat16,
                          tl_max=1024, tq_max=4096):
    """x: (B, Nt, Nr, Nc) -> (B, k, nt_blocks, Nr//sdf, Nc//sdf), float32."""
    B, Nt, Nr, Nc = x.shape
    k, L = ct.shape
    assert Nt == nt_blocks * L
    assert Nr % sdf == 0 and Nc % sdf == 0
    Hout, Wout = Nr // sdf, Nc // sdf
    N = B * nt_blocks
    Q = Nr * Nc

    # bf16 streaming is the default for the HBM-bound pass-1 matmul; the MXU
    # accumulates in f32.  Pass compute_dtype=jnp.float32 (or None to keep
    # x.dtype) for full-precision streaming (bit-tight numerics).
    cdt = jnp.dtype(compute_dtype) if compute_dtype is not None else x.dtype
    xc = x.astype(cdt)
    inter_dtype = jnp.bfloat16 if cdt == jnp.bfloat16 else jnp.float32

    if sdf == 1:
        # Fold the (k,1,1) spatial weights into the temporal matrix: one
        # matmul, no second pass, no intermediate.
        ct_eff = (ct.astype(jnp.float32)
                  * wxy.reshape(k, 1).astype(jnp.float32)).astype(cdt)
        x3 = xc.reshape(N, L, Q)                    # metadata reshape only
        out, packed = _temporal_project(x3, ct_eff, out_dtype=jnp.float32,
                                        nt_blocks=nt_blocks, fold_nt=True,
                                        tl_max=tl_max, tq_max=tq_max)
        if packed:                                  # (B, k, nt_blocks*Q)
            return out.reshape(B, k, nt_blocks, Nr, Nc)
        return out.reshape(B, nt_blocks, k, Nr, Nc).transpose(0, 2, 1, 3, 4)

    # Pass 1: temporal projection on the ORIGINAL layout (metadata reshape
    # only, no full-input HBM transpose).  >99% of HBM bytes / FLOPs are here.
    # The intermediate is stored in the (half-width) compute dtype.
    x3 = xc.reshape(N, L, Q)
    tmp, _ = _temporal_project(x3, ct.astype(cdt), out_dtype=inter_dtype,
                               nt_blocks=1, fold_nt=False,
                               tl_max=tl_max, tq_max=tq_max)    # (N, k, Q)

    # Pass 2: grouped sdf x sdf spatial pooling.  The patch-major transpose
    # below touches only the k/L-times-smaller (and possibly bf16)
    # intermediate, never the full input.
    # TODO(synk): fuse the pooling into pass-1's finalize (needs TQ a multiple
    # of sdf*Nc plus strided in-kernel patch reads) to drop this intermediate
    # round-trip entirely; at typical k << L it costs only a few percent.
    tpm = tmp.reshape(N, k, Hout, sdf, Wout, sdf)
    tpm = tpm.transpose(0, 3, 5, 1, 2, 4).reshape(N, sdf * sdf, k, Hout * Wout)
    wxy_flat = wxy.reshape(k, sdf * sdf).astype(jnp.float32)
    out, packed = _spatial_pool(tpm, wxy_flat, nt_blocks=nt_blocks,
                                tq_max=tq_max)                   # f32
    if packed:                                      # (B, k, nt_blocks*Qout)
        return out.reshape(B, k, nt_blocks, Hout, Wout)
    return out.reshape(B, nt_blocks, k, Hout, Wout).transpose(0, 2, 1, 3, 4)


# ----------------------------------------------------------------------------
# Module-equivalent wrapper.
# ----------------------------------------------------------------------------
class CSPHEncodingLayer:
    def __init__(self, k=2, num_bins=1024, tblock_init='TruncFourier',
                 optimize_tdim_codes=False, nt_blocks=1, spatial_down_factor=1,
                 encoding_type='separable', seed=0,
                 compute_dtype=jnp.bfloat16, tl_max=1024, tq_max=4096):
        assert num_bins % nt_blocks == 0
        if encoding_type != 'separable':
            # TODO(synk): 'full' encoding_type (single (L,sdf,sdf) Conv3d) not implemented.
            raise NotImplementedError("only encoding_type='separable' implemented")
        self.k = k
        self.num_bins = num_bins
        self.nt_blocks = nt_blocks
        self.tblock_len = num_bins // nt_blocks
        self.spatial_down_factor = spatial_down_factor
        self.compute_dtype = compute_dtype
        self.tl_max = tl_max
        self.tq_max = tq_max

        # Cmat_tdim weights: Conv3d(1, k, (L,1,1)) -> stored here as (k, L).
        if tblock_init == 'TruncFourier':
            C = _trunc_fourier_cmat(self.tblock_len, k)          # (L, k)
        elif tblock_init == 'Rand':
            C = _rand_cmat(self.tblock_len, k, seed=seed)        # (L, k)
        else:
            raise ValueError('Unsupported tblock_init: {}'.format(tblock_init))
        self.Cmat_tdim = jnp.asarray(C.T, dtype=jnp.float32)     # (k, L)

        # Cmat_xydim weights: grouped Conv3d(k, k, (1,sdf,sdf), groups=k),
        # PyTorch default U(-1/sqrt(fan_in), 1/sqrt(fan_in)), fan_in = sdf*sdf.
        fan_in = spatial_down_factor * spatial_down_factor
        bound = 1.0 / np.sqrt(fan_in)
        self.Cmat_xydim = jax.random.uniform(
            jax.random.PRNGKey(seed + 1),
            (k, spatial_down_factor, spatial_down_factor),
            dtype=jnp.float32, minval=-bound, maxval=bound)

    def __call__(self, inputs):
        """inputs: (B, Nt, Nr, Nc) -> (B, k, nt_blocks, Nr//sdf, Nc//sdf)."""
        return csph_encode_separable(inputs, self.Cmat_tdim, self.Cmat_xydim,
                                     self.nt_blocks, self.spatial_down_factor,
                                     compute_dtype=self.compute_dtype,
                                     tl_max=self.tl_max, tq_max=self.tq_max)


# ----------------------------------------------------------------------------
# Pure-JAX reference (mirrors the two Conv3d ops) for verification.
# ----------------------------------------------------------------------------
def _reference_forward(x, ct, wxy, nt_blocks, sdf):
    B, Nt, Nr, Nc = x.shape
    k, L = ct.shape
    xr = x.reshape(B, nt_blocks, L, Nr, Nc)
    tmp = jnp.einsum('bnlrc,kl->bknrc', xr, ct)                  # temporal conv
    Hout, Wout = Nr // sdf, Nc // sdf
    tmpr = tmp.reshape(B, k, nt_blocks, Hout, sdf, Wout, sdf)
    out = jnp.einsum('bknhiwj,kij->bknhw', tmpr, wxy)            # grouped spatial conv
    return out


if __name__ == "__main__":
    # Config 1: sdf > 1, nt_blocks > 1, default bf16 streaming (two-pass path).
    B, Nt, Nr, Nc = 2, 32, 16, 16
    k, nt_blocks, sdf = 4, 2, 2
    layer = CSPHEncodingLayer(k=k, num_bins=Nt, tblock_init='TruncFourier',
                              nt_blocks=nt_blocks, spatial_down_factor=sdf,
                              encoding_type='separable', seed=0)
    x = jax.random.normal(jax.random.PRNGKey(0), (B, Nt, Nr, Nc), dtype=jnp.float32)
    out = jax.block_until_ready(layer(x))
    assert out.shape == (B, k, nt_blocks, Nr // sdf, Nc // sdf), out.shape
    ref = _reference_forward(x, layer.Cmat_tdim, layer.Cmat_xydim, nt_blocks, sdf)
    np.testing.assert_allclose(np.asarray(out), np.asarray(ref),
                               rtol=5e-2, atol=1e-1)   # bf16 streaming path

    # Config 2: sdf == 1, nt_blocks == 1, f32 opt-out (single-pass fast path).
    layer1 = CSPHEncodingLayer(k=2, num_bins=Nt, tblock_init='Rand',
                               nt_blocks=1, spatial_down_factor=1, seed=3,
                               compute_dtype=jnp.float32)
    out1 = jax.block_until_ready(layer1(x))
    assert out1.shape == (B, 2, 1, Nr, Nc), out1.shape
    ref1 = _reference_forward(x, layer1.Cmat_tdim, layer1.Cmat_xydim, 1, 1)
    np.testing.assert_allclose(np.asarray(out1), np.asarray(ref1),
                               rtol=1e-4, atol=1e-4)

    # Config 3: sdf == 1, nt_blocks > 1 -> packed (B, k, nt*Q) out_spec path
    # (final layout written directly, no output transpose), f32.
    layer2 = CSPHEncodingLayer(k=3, num_bins=Nt, tblock_init='TruncFourier',
                               nt_blocks=2, spatial_down_factor=1, seed=5,
                               compute_dtype=jnp.float32)
    out2 = jax.block_until_ready(layer2(x))
    assert out2.shape == (B, 3, 2, Nr, Nc), out2.shape
    ref2 = _reference_forward(x, layer2.Cmat_tdim, layer2.Cmat_xydim, 2, 1)
    np.testing.assert_allclose(np.asarray(out2), np.asarray(ref2),
                               rtol=1e-4, atol=1e-4)

    # Config 4: L-tiled accumulator path (L=256, TL=128 via tl_max override),
    # resident coding matrix sliced in-kernel, f32.
    layerL = CSPHEncodingLayer(k=4, num_bins=256, tblock_init='TruncFourier',
                               nt_blocks=1, spatial_down_factor=1, seed=7,
                               compute_dtype=jnp.float32, tl_max=128, tq_max=256)
    xL = jax.random.normal(jax.random.PRNGKey(1), (2, 256, Nr, Nc), dtype=jnp.float32)
    outL = jax.block_until_ready(layerL(xL))
    assert outL.shape == (2, 4, 1, Nr, Nc), outL.shape
    refL = _reference_forward(xL, layerL.Cmat_tdim, layerL.Cmat_xydim, 1, 1)
    np.testing.assert_allclose(np.asarray(outL), np.asarray(refL),
                               rtol=1e-4, atol=1e-4)

    print("KERNEL_OK")
</pallas_src>

<mosaic_0001>
module attributes {stable_mosaic.version = 11 : i64} {
  func.func @_temporal_kernel_single(%arg0: i32, %arg1: i32, %arg2: memref<1x16x256xbf16, #tpu.memory_space<vmem>>, %arg3: memref<4x16xbf16, #tpu.memory_space<vmem>>, %arg4: memref<1x4x256xbf16, #tpu.memory_space<vmem>>) attributes {dimension_semantics = [#tpu.dimension_semantics<parallel>, #tpu.dimension_semantics<parallel>], iteration_bounds = array<i64: 4, 1>, scalar_prefetch = 0 : i64, scratch_operands = 0 : i64, tpu.core_type = #tpu.core_type<tc>, window_params = [{transform_indices = @transform_0, window_bounds = array<i64: 1, 16, 256>}, {pipeline_mode = #tpu.pipeline_mode<synchronous>, transform_indices = @transform_1, window_bounds = array<i64: 4, 16>}, {transform_indices = @transform_2, window_bounds = array<i64: 1, 4, 256>}]} {
    %c0 = arith.constant 0 : index
    %c0_0 = arith.constant 0 : index
    %0 = vector.load %arg3[%c0, %c0_0] : memref<4x16xbf16, #tpu.memory_space<vmem>>, vector<4x16xbf16>
    %c0_1 = arith.constant 0 : index
    %c0_2 = arith.constant 0 : index
    %c0_3 = arith.constant 0 : index
    %1 = vector.load %arg2[%c0_1, %c0_2, %c0_3] : memref<1x16x256xbf16, #tpu.memory_space<vmem>>, vector<1x16x256xbf16>
    %2 = vector.shape_cast %1 : vector<1x16x256xbf16> to vector<16x256xbf16>
    %cst = arith.constant dense<0.000000e+00> : vector<4x256xf32>
    %3 = tpu.matmul %0, %2, %cst {dimension_numbers = #tpu.dot_dimension_numbers<[1], [0], [0], [1], [0, 0, 1, 1], [], []>} : vector<4x16xbf16>, vector<16x256xbf16>, vector<4x256xf32> -> vector<4x256xf32>
    %4 = arith.truncf %3 : vector<4x256xf32> to vector<4x256xbf16>
    %c0_4 = arith.constant 0 : index
    %c0_5 = arith.constant 0 : index
    %c0_6 = arith.constant 0 : index
    %5 = vector.load %arg4[%c0_4, %c0_5, %c0_6] : memref<1x4x256xbf16, #tpu.memory_space<vmem>>, vector<1x4x256xbf16>
    %6 = vector.shape_cast %5 : vector<1x4x256xbf16> to vector<4x256xbf16>
    %7 = vector.shape_cast %4 : vector<4x256xbf16> to vector<1x4x256xbf16>
    tpu.vector_store %arg4[%c0_4, %c0_5, %c0_6], %7 {strides = array<i32>} : memref<1x4x256xbf16, #tpu.memory_space<vmem>>, vector<1x4x256xbf16>,
    return
  }
  func.func @transform_0(%arg0: i32, %arg1: i32) -> (i32, i32, i32) {
    %c0_i32 = arith.constant 0 : i32
    %c0_i32_0 = arith.constant 0 : i32
    return %arg0, %c0_i32, %arg1 : i32, i32, i32
  }
  func.func @transform_1(%arg0: i32, %arg1: i32) -> (i32, i32) {
    %c0_i32 = arith.constant 0 : i32
    %c0_i32_0 = arith.constant 0 : i32
    %c0_i32_1 = arith.constant 0 : i32
    return %c0_i32, %c0_i32_0 : i32, i32
  }
  func.func @transform_2(%arg0: i32, %arg1: i32) -> (i32, i32, i32) {
    %c0_i32 = arith.constant 0 : i32
    %c0_i32_0 = arith.constant 0 : i32
    return %arg0, %c0_i32, %arg1 : i32, i32, i32
  }
}

</mosaic_0001>

<llo_original>
// kernel: tpu_custom_call.1
$region0: #{tpu_custom_call.1}
  #allocation0 [shape = 'u32[]', space=smem, size = 0x4, offset = 0x4, fixed_abs, tag = 'smem constant byte address 0x4 - core index']
  #allocation1 [shape = 'u32[72,128]{1,0:T(1,128)}', space=vmem, size = 0x9000, scoped, tag = 'internal scratch']
  %s0 = inlined_call_operand.hbm [shape: bf16[4,16,256], index: 0, kind: input, shape index: {}]
  %s1 = inlined_call_operand.hbm [shape: bf16[4,16], index: 1, kind: input, shape index: {}]
  %s2 = inlined_call_operand.hbm [shape: bf16[4,4,256], index: 2, kind: output, shape index: {}]
  %s3 = sld [smem:[#allocation0]]
  $region49: #{tpu_custom_call.1} parent=0
    _
  %s5 = ssub.s32 1, %s3
  %s6 = scalar_select 0, %s5, %s3
  $region1: #{tpu_custom_call.1} parent=0
    #allocation2 [shape = 'u8[16384]{0}', space=vmem, size = 0x4000, scoped, tag = 'input window, operand 0']
    #allocation3 [shape = 's32[2]{0}', space=sflag, size = 0x8, scoped, tag = 'scoped memory for tpu_custom_call.1']
    #allocation4 [shape = 's32[2]{0}', space=sflag, size = 0x8, scoped, tag = 'scoped memory for tpu_custom_call.1']
    #allocation5 [shape = 'u8[1024]{0}', space=vmem, size = 0x400, scoped, tag = 'input window, operand 1, single buffered']
    #allocation6 [shape = 's32[1]{0}', space=sflag, size = 0x4, scoped, tag = 'scoped memory for tpu_custom_call.1']
    #allocation7 [shape = 'u8[4096]{0}', space=vmem, size = 0x1000, scoped, tag = 'output window, operand 0']
    %7 = vsyncpa [#allocation3], 0
    %s8 = scalar_lea.sflag [#allocation3], 1
    %9 = vsyncpa %s8, 0
    %10 = vsyncpa [#allocation6], 0
    %11 = vsyncpa [#allocation4], 0
    %s12 = scalar_lea.sflag [#allocation4], 1
    %13 = vsyncpa %s12, 0
    loop: start=0, step=1, limit=6
    $region2: #{tpu_custom_call.1} parent=1 // loop_pre_header
      _
    $region3: #{tpu_custom_call.1} parent=1 // loop_header
      %s15 = sphi 0, %s19
      %p16 = scmp.ge.s32.totalorder %s15, 6
      %s22 = sphi 0, %s34
      %s23 = sphi 0, %s30
      %s24 = sphi 0, %s22
      %s25 = sphi 0, %s23
      %s26 = sphi 0, %s24
      %s27 = sphi 0, %s25
      %s39 = sphi 0, %s41
      %s42 = sphi 0, %s39
      %s43 = sphi 0, %s42
      %s59 = sphi 0, %s43
      %s63 = sphi 0, %s63
      %s65 = sphi 0, %s63
      %s66 = sphi 0, %s65
      %s80 = sphi 0, %s66
      %s88 = sphi 0, %s90
      %s91 = sphi 0, %s88
      %s92 = sphi 0, %s91
      %s108 = sphi 0, %s92
    $region4: #{tpu_custom_call.1} parent=1 // loop_header_branch
      %18 = sbr.rel (%p16) target = $region8
    $region5: #{tpu_custom_call.1} parent=1 // loop_body
      %s20 = ssub.s32 %s15, 1
      %s21 = ssub.s32 %s15, 2
      %s28 = sadd.s32 1, %s23
      %p29 = scmp.ge.s32.totalorder %s28, 1
      %s30 = scalar_select %p29, 0, %s28
      %s31 = sadd.s32 1, %s22
      %s32 = scalar_select %p29, %s31, %s22
      %p33 = scmp.ge.s32.totalorder %s32, 4
      %s34 = scalar_select %p33, 0, %s32
      %s35 = ssub.s32 %s22, %s34
      %s36 = ssub.s32 %s23, %s30
      %s37 = sor.u32 %s35, %s36
      %p38 = scmp.eq.s32.totalorder %s37, 0
      %s40 = sadd.s32 %s39, 1
      %s41 = scalar_select %p38, %s39, %s40
      %p44 = pneg %p38
      %p45 = scmp.eq.s32.totalorder %s15, 3
      %p46 = por %p44, %p45
      %p47 = scmp.ne.s32.totalorder %s39, %s42
      %p48 = scmp.eq.s32.totalorder %s15, 0
      %p49 = por %p47, %p48
      %p50 = scmp.ne.s32.totalorder %s39, %s42
      %p51 = scmp.eq.s32.totalorder %s20, 3
      %p52 = por %p50, %p51
      %p53 = scmp.ne.s32.totalorder %s42, %s43
      %p54 = scmp.eq.s32.totalorder %s20, 0
      %p55 = por %p53, %p54
      %p56 = scmp.ne.s32.totalorder %s42, %s43
      %p57 = scmp.eq.s32.totalorder %s21, 3
      %p58 = por %p56, %p57
      %p60 = scmp.ne.s32.totalorder %s43, %s59
      %p61 = scmp.eq.s32.totalorder %s21, 0
      %p62 = por %p60, %p61
      %s64 = sadd.s32 %s63, 1
      %p67 = scmp.eq.s32.totalorder %s15, 3
      %p68 = scmp.ne.s32.totalorder %s63, %s65
      %p69 = scmp.eq.s32.totalorder %s15, 0
      %p70 = por %p68, %p69
      %p71 = scmp.ne.s32.totalorder %s63, %s65
      %p72 = scmp.eq.s32.totalorder %s20, 3
      %p73 = por %p71, %p72
      %p74 = scmp.ne.s32.totalorder %s65, %s66
      %p75 = scmp.eq.s32.totalorder %s20, 0
      %p76 = por %p74, %p75
      %p77 = scmp.ne.s32.totalorder %s65, %s66
      %p78 = scmp.eq.s32.totalorder %s21, 3
      %p79 = por %p77, %p78
      %p81 = scmp.ne.s32.totalorder %s66, %s80
      %p82 = scmp.eq.s32.totalorder %s21, 0
      %p83 = por %p81, %p82
      %s84 = ssub.s32 %s22, %s34
      %s85 = ssub.s32 %s23, %s30
      %s86 = sor.u32 %s84, %s85
      %p87 = scmp.eq.s32.totalorder %s86, 0
      %s89 = sadd.s32 %s88, 1
      %s90 = scalar_select %p87, %s88, %s89
      %p93 = pneg %p87
      %p94 = scmp.eq.s32.totalorder %s15, 3
      %p95 = por %p93, %p94
      %p96 = scmp.ne.s32.totalorder %s88, %s91
      %p97 = scmp.eq.s32.totalorder %s15, 0
      %p98 = por %p96, %p97
      %p99 = scmp.ne.s32.totalorder %s88, %s91
      %p100 = scmp.eq.s32.totalorder %s20, 3
      %p101 = por %p99, %p100
      %p102 = scmp.ne.s32.totalorder %s91, %s92
      %p103 = scmp.eq.s32.totalorder %s20, 0
      %p104 = por %p102, %p103
      %p105 = scmp.ne.s32.totalorder %s91, %s92
      %p106 = scmp.eq.s32.totalorder %s21, 3
      %p107 = por %p105, %p106
      %p109 = scmp.ne.s32.totalorder %s92, %s108
      %p110 = scmp.eq.s32.totalorder %s21, 0
      %p111 = por %p109, %p110
      %p112 = scmp.le.s32.totalorder 1, %s15
      %p113 = scmp.lt.s32.totalorder %s15, 5
      %p114 = pnand %p112, %p113
      %p115 = pneg %p114
      // Predicated region
      $region9: #{tpu_custom_call.1} parent=5 // pred_check
        _
      $region10: #{tpu_custom_call.1} parent=5 // pred_check_branch
        %117 = sbr.rel (%p114) target = $region12
      $region11: #{tpu_custom_call.1} parent=5 // pred_region
        %s118 = ssub.s32 %s15, 1
        // Predicated region
        $region13: #{tpu_custom_call.1} parent=11 // pred_check
          %p119 = pneg %p76
        $region14: #{tpu_custom_call.1} parent=11 // pred_check_branch
          %121 = sbr.rel (%p119) target = $region16
        $region15: #{tpu_custom_call.1} parent=11 // pred_region
          %123 = vsyncadd [#allocation6], 0
          %s125 = sshll.u32 %s1, 4
          %s126 = int_to_ptr.hbm [resolvable:$true] %s125
          %s127 = sshll.u32 [#allocation5], 4
          %s128 = int_to_ptr.vmem [resolvable:$true] %s127
          %130 = dma.hbm_to_vmem [thread:$0]  %s126, 32, %s128, [#allocation6]
        $region16: #{tpu_custom_call.1} parent=11 // pred_fallthru
          _
      $region12: #{tpu_custom_call.1} parent=5 // pred_fallthru
        _
      %p131 = scmp.lt.s32.totalorder %s15, 4
      // Predicated region
      $region17: #{tpu_custom_call.1} parent=5 // pred_check
        %p132 = pneg %p131
      $region18: #{tpu_custom_call.1} parent=5 // pred_check_branch
        %134 = sbr.rel (%p132) target = $region20
      $region19: #{tpu_custom_call.1} parent=5 // pred_region
        // Predicated region
        $region21: #{tpu_custom_call.1} parent=19 // pred_check
          %p135 = pneg %p49
        $region22: #{tpu_custom_call.1} parent=19 // pred_check_branch
          %137 = sbr.rel (%p135) target = $region24
        $region23: #{tpu_custom_call.1} parent=19 // pred_region
          %s138 = sand.u32 %s39, 1
          %s139 = scalar_lea.sflag [#allocation3], %s138
          %s140 = sand.u32 %s39, 1
          %s141 = smul.addr %s140, 16
          %s142 = scalar_lea.vmem [#allocation2], %s141
          %s143 = smul.u32 2, %s23
          %145 = vsyncadd %s139, 0
          %s146 = smul.addr %s22, 4
          %s147 = sadd.s32 %s143, %s146
          %s148 = smul.addr %s147, 4
          %s149 = scalar_lea.hbm %s0, %s148
          %s150 = sshll.u32 %s149, 4
          %s151 = int_to_ptr.hbm [resolvable:$true] %s150
          %s152 = sshll.u32 %s142, 4
          %s153 = int_to_ptr.vmem [resolvable:$true] %s152
          %158 = dma.hbm_to_vmem [thread:$0]  %s151, 256, %s153, %s139, 128, 128, 8
        $region24: #{tpu_custom_call.1} parent=19 // pred_fallthru
          _
      $region20: #{tpu_custom_call.1} parent=5 // pred_fallthru
        _
      %p159 = scmp.le.s32.totalorder 1, %s15
      %p160 = scmp.lt.s32.totalorder %s15, 5
      %p161 = pnand %p159, %p160
      %p162 = pneg %p161
      // Predicated region
      $region25: #{tpu_custom_call.1} parent=5 // pred_check
        _
      $region26: #{tpu_custom_call.1} parent=5 // pred_check_branch
        %164 = sbr.rel (%p161) target = $region28
      $region27: #{tpu_custom_call.1} parent=5 // pred_region
        %s165 = ssub.s32 %s15, 1
        %s166 = sand.u32 %s42, 1
        %s167 = scalar_lea.sflag [#allocation3], %s166
        %s168 = sand.u32 %s42, 1
        %s169 = smul.addr %s168, 16
        %s170 = scalar_lea.vmem [#allocation2], %s169
        // Predicated region
        $region29: #{tpu_custom_call.1} parent=27 // pred_check
          %p171 = pneg %p55
        $region30: #{tpu_custom_call.1} parent=27 // pred_check_branch
          %173 = sbr.rel (%p171) target = $region32
        $region31: #{tpu_custom_call.1} parent=27 // pred_region
          %175 = dma.done %s167, 256
        $region32: #{tpu_custom_call.1} parent=27 // pred_fallthru
          _
        // Predicated region
        $region33: #{tpu_custom_call.1} parent=27 // pred_check
          %p176 = pneg %p76
        $region34: #{tpu_custom_call.1} parent=27 // pred_check_branch
          %178 = sbr.rel (%p176) target = $region36
        $region35: #{tpu_custom_call.1} parent=27 // pred_region
          %180 = dma.done [#allocation6], 32
        $region36: #{tpu_custom_call.1} parent=27 // pred_fallthru
          _
        %s181 = sand.u32 %s42, 1
        %s182 = scalar_lea.sflag [#allocation3], %s181
        %s183 = sand.u32 %s42, 1
        %s184 = smul.addr %s183, 16
        %s185 = scalar_lea.vmem [#allocation2], %s184
        %p186 = pneg %p55
        %p187 = pneg %p52
        %p188 = pneg %p76
        %p189 = pneg %p73
        %p190 = pneg %p104
        %p191 = pneg %p101
        %s192 = sand.u32 %s91, 1
        %s193 = scalar_lea.sflag [#allocation4], %s192
        %s194 = sand.u32 %s91, 1
        %s195 = smul.addr %s194, 4
        %s196 = scalar_lea.vmem [#allocation7], %s195
        %s197 = smul.u32 2, %s25
        %s198 = smul.u32 2, %s25
        %v200 = vld [vmem:[#allocation5] sm:$0x3]
        %v201 = vld [vmem:[%s170] sm:$0xff]
        %v202 = vld [vmem:[%s170 + $0x8] sm:$0xff]
        %v205 = vunpack.c.l.b16 %v201
        %v206 = vunpack.c.h.b16 %v201
        %v207 = vunpack.c.l.b16 %v202
        %v208 = vunpack.c.h.b16 %v202
        %v209 = vpack.c.b16 %v207, %v205
        %v210 = vpack.c.b16 %v208, %v206
        %vm213 = vcmask 130048
        %v215 = vsel %vm213, %v200, 0
        %217 = vmatpush.bf16.msra.mxu0 0
        %218 = vmatpush.bf16.msra.mxu0 0
        %219 = vmatpush.bf16.msra.mxu0 0
        %220 = vmatpush.bf16.msra.mxu0 0
        %221 = vmatpush.bf16.msra.mxu0 0
        %222 = vmatpush.bf16.msra.mxu0 0
        %223 = vmatpush.bf16.msra.mxu0 0
        %224 = vmatpush.bf16.msra.mxu0 %v209
        %225 = vmatmul.bf16.gmra.mxu0 %v215
        %v226 = vpop.f32.mrf.mxu0
        %v227 = vadd.f32 0.0, %v226
        %v228 = vpop.f32.mrf.mxu0
        %229 = vdwg.mxu0
        %230 = vmatpush.bf16.msra.mxu0 0
        %231 = vmatpush.bf16.msra.mxu0 0
        %232 = vmatpush.bf16.msra.mxu0 0
        %233 = vmatpush.bf16.msra.mxu0 0
        %234 = vmatpush.bf16.msra.mxu0 0
        %235 = vmatpush.bf16.msra.mxu0 0
        %236 = vmatpush.bf16.msra.mxu0 0
        %237 = vmatpush.bf16.msra.mxu0 %v210
        %238 = vmatmul.bf16.gmra.mxu0 %v215
        %v239 = vpop.f32.mrf.mxu0
        %v240 = vadd.f32 0.0, %v239
        %v241 = vpop.f32.mrf.mxu0
        %242 = vdwg.mxu0
        %v243 = vpack.c.bf16 %v240, %v227
        %v245 = vrot.slane %v243, 2
        %vm246 = vcmask 1041408
        %v249 = vsel %vm246, %v243, %v245
        %251 = vst [vmem:[%s196] sm:$0xf] %v249
        %s252 = sand.u32 %s91, 1
        %s253 = scalar_lea.sflag [#allocation4], %s252
        %s254 = sand.u32 %s91, 1
        %s255 = smul.addr %s254, 4
        %s256 = scalar_lea.vmem [#allocation7], %s255
        // Predicated region
        $region37: #{tpu_custom_call.1} parent=27 // pred_check
          %p257 = pneg %p101
        $region38: #{tpu_custom_call.1} parent=27 // pred_check_branch
          %259 = sbr.rel (%p257) target = $region40
        $region39: #{tpu_custom_call.1} parent=27 // pred_region
          %s260 = smul.u32 2, %s25
          %262 = vsyncadd %s253, 0
          %s263 = smul.addr %s24, 2
          %s264 = sadd.s32 %s260, %s263
          %s265 = smul.addr %s264, 2
          %s266 = scalar_lea.hbm %s2, %s265
          %s268 = sshll.u32 %s256, 4
          %s269 = int_to_ptr.vmem [resolvable:$true] %s268
          %s270 = sshll.u32 %s266, 4
          %s271 = int_to_ptr.hbm [resolvable:$true] %s270
          %273 = dma.vmem_to_hbm [thread:$0]  %s269, 64, %s271, %s253
        $region40: #{tpu_custom_call.1} parent=27 // pred_fallthru
          _
      $region28: #{tpu_custom_call.1} parent=5 // pred_fallthru
        _
      %p274 = scmp.le.s32.totalorder 2, %s15
      // Predicated region
      $region41: #{tpu_custom_call.1} parent=5 // pred_check
        %p275 = pneg %p274
      $region42: #{tpu_custom_call.1} parent=5 // pred_check_branch
        %277 = sbr.rel (%p275) target = $region44
      $region43: #{tpu_custom_call.1} parent=5 // pred_region
        %s278 = ssub.s32 %s15, 2
        // Predicated region
        $region45: #{tpu_custom_call.1} parent=43 // pred_check
          %p279 = pneg %p107
        $region46: #{tpu_custom_call.1} parent=43 // pred_check_branch
          %281 = sbr.rel (%p279) target = $region48
        $region47: #{tpu_custom_call.1} parent=43 // pred_region
          %s282 = sand.u32 %s92, 1
          %s283 = scalar_lea.sflag [#allocation4], %s282
          %s284 = sand.u32 %s92, 1
          %s285 = smul.addr %s284, 4
          %s286 = scalar_lea.vmem [#allocation7], %s285
          %288 = dma.done %s283, 64
        $region48: #{tpu_custom_call.1} parent=43 // pred_fallthru
          _
      $region44: #{tpu_custom_call.1} parent=5 // pred_fallthru
        _
    $region6: #{tpu_custom_call.1} parent=1 // loop_footer
      %s19 = sadd.s32 1, %s15
    $region7: #{tpu_custom_call.1} parent=1 // loop_footer_branch
      %14 = sbr.rel target = $region3
    $region8: #{tpu_custom_call.1} parent=1 // loop_exit
      _
    %289 = vsyncpa [#allocation3], 1
    %s290 = scalar_lea.sflag [#allocation3], 1
    %291 = vsyncpa %s290, 1
    %292 = vsyncpa [#allocation6], 1
    %293 = vsyncpa [#allocation4], 1
    %s294 = scalar_lea.sflag [#allocation4], 1
    %295 = vsyncpa %s294, 1

</llo_original>
